<compile_context>
chip_gen: v7x
topology: tpu7x:2x2x1
jax: 0.10.0
libtpu: 0.0.40
codegen_flags: <defaults>
</compile_context>

<pallas_src>
import functools

import jax
import jax.numpy as jnp
import numpy as np
from jax.experimental import pallas as pl
from jax.experimental.pallas import tpu as pltpu

IMAGE_SIZE = 16   # small stand-in for the original 300x300 spatial size
LANE = 128        # TPU lane width
TM_MAX = 512      # M-tile rows: fits VMEM w/ double buffering on v5e/v6e/v7x


def _round_up(n, m):
    return ((n + m - 1) // m) * m


# ----------------------------- Pallas kernel ------------------------------- #
def _mm_bias_kernel(p_ref, w_ref, b_ref, o_ref, *, apply_lrelu):
    """Fused (TM,K)@(K,Cout_pad) matmul + bias (+ LeakyReLU(0.01)), f32 accumulate."""
    acc = jnp.dot(p_ref[...], w_ref[...], preferred_element_type=jnp.float32)
    acc = acc + b_ref[...]
    if apply_lrelu:
        acc = jnp.where(acc >= 0.0, acc, 0.01 * acc)
    o_ref[...] = acc


# ------------------------------- glue (JAX) -------------------------------- #
def _im2col_nhwc(x, k, stride, pad):
    """x: (B, H, W, C) -> (B*Ho*Wo, k*k*C) patches, (kh, kw, C) K-ordering."""
    B, H, W, C = x.shape
    xp = jnp.pad(x, ((0, 0), (pad, pad), (pad, pad), (0, 0)))
    Ho = (H + 2 * pad - k) // stride + 1
    Wo = (W + 2 * pad - k) // stride + 1
    cols = []
    for kh in range(k):
        for kw in range(k):
            cols.append(xp[:, kh:kh + stride * Ho:stride, kw:kw + stride * Wo:stride, :])
    p = jnp.stack(cols, axis=3)                     # (B, Ho, Wo, k*k, C)
    return p.reshape(B * Ho * Wo, k * k * C), Ho, Wo


def conv2d_pallas(x, w, b, *, stride, pad, apply_lrelu):
    """Conv2d (PyTorch semantics; x is NHWC, w is OIHW) via tiled Pallas matmul."""
    B, H, W, C = x.shape
    Cout, Cin, kh, kw = w.shape
    assert Cin == C and kh == kw

    patches, Ho, Wo = _im2col_nhwc(x, kh, stride, pad)      # (M, K) with (kh,kw,C) order
    M, K = patches.shape

    # OIHW -> (kh, kw, Cin, Cout), flattened to (K, Cout); matches patch K-ordering.
    w_mat = jnp.transpose(w, (2, 3, 1, 0)).reshape(K, Cout)

    # Lane-dense output: pad Cout up to a multiple of 128.
    Cout_pad = _round_up(Cout, LANE)
    w_pad = jnp.zeros((K, Cout_pad), jnp.bfloat16).at[:, :Cout].set(
        w_mat.astype(jnp.bfloat16))
    b_pad = jnp.zeros((1, Cout_pad), jnp.float32).at[0, :Cout].set(
        b.astype(jnp.float32))

    # M tiling (sublane-aligned); bf16 patches halve HBM traffic.
    M8 = _round_up(M, 8)
    TM = min(TM_MAX, M8)
    M_pad = _round_up(M, TM)
    patches_p = jnp.pad(patches.astype(jnp.bfloat16), ((0, M_pad - M), (0, 0)))

    cost = pl.CostEstimate(
        flops=2 * M_pad * K * Cout_pad,
        transcendentals=0,
        bytes_accessed=M_pad * K * 2 + K * Cout_pad * 2 + M_pad * Cout_pad * 4,
    )

    out = pl.pallas_call(
        functools.partial(_mm_bias_kernel, apply_lrelu=apply_lrelu),
        out_shape=jax.ShapeDtypeStruct((M_pad, Cout_pad), jnp.float32),
        grid=(M_pad // TM,),
        in_specs=[
            pl.BlockSpec((TM, K), lambda i: (i, 0)),          # patches: tiled along M
            pl.BlockSpec((K, Cout_pad), lambda i: (0, 0)),    # weights: resident
            pl.BlockSpec((1, Cout_pad), lambda i: (0, 0)),    # bias: resident
        ],
        out_specs=pl.BlockSpec((TM, Cout_pad), lambda i: (i, 0)),
        compiler_params=pltpu.CompilerParams(
            dimension_semantics=("parallel",),                # shard M tiles across TCs
            vmem_limit_bytes=64 * 1024 * 1024,
        ),
        cost_estimate=cost,
    )(patches_p, w_pad, b_pad)

    # strip M/Cout padding, keep NHWC (no inter-layer NCHW transpose)
    return out[:M, :Cout].reshape(B, Ho, Wo, Cout)


def feature_extractor_forward(x, c, params):
    """x: (B, 3, H, W) NCHW (PyTorch layout), c: (B, c_dim) -> (B, Cout*Ho*Wo)."""
    B, _, H, W = x.shape
    x_nhwc = jnp.transpose(x, (0, 2, 3, 1))
    c_map = jnp.broadcast_to(c[:, None, None, :], (B, H, W, c.shape[1]))
    h = jnp.concatenate([x_nhwc, c_map], axis=-1)            # same channel order as torch.cat
    h = conv2d_pallas(h, params["w1"], params["b1"], stride=2, pad=1, apply_lrelu=True)
    h = conv2d_pallas(h, params["w2"], params["b2"], stride=2, pad=1, apply_lrelu=False)
    # single channel-major reorder at the very end == torch's NCHW .view(B, -1)
    return jnp.transpose(h, (0, 3, 1, 2)).reshape(B, -1)


# --------------------------- reference (for check) -------------------------- #
def _ref_forward(x, c, params):
    B, _, H, W = x.shape
    c_map = jnp.broadcast_to(c[:, :, None, None], (B, c.shape[1], H, W))
    h = jnp.concatenate([x, c_map], axis=1)

    def conv(z, w, b):
        y = jax.lax.conv_general_dilated(
            z, w, (2, 2), [(1, 1), (1, 1)],
            dimension_numbers=("NCHW", "OIHW", "NCHW"))
        return y + b[None, :, None, None]

    h = conv(h, params["w1"], params["b1"])
    h = jnp.where(h >= 0.0, h, 0.01 * h)
    h = conv(h, params["w2"], params["b2"])
    return h.reshape(B, -1)


if __name__ == "__main__":
    key = jax.random.PRNGKey(0)
    B, C_IMG, C_DIM = 2, 3, 5
    H = W = IMAGE_SIZE
    CONV_DIM = 8

    k1, k2, k3, k4, k5, k6 = jax.random.split(key, 6)
    x = jax.random.normal(k1, (B, C_IMG, H, W), dtype=jnp.float32)
    c = jax.random.normal(k2, (B, C_DIM), dtype=jnp.float32)

    params = {
        "w1": 0.1 * jax.random.normal(k3, (CONV_DIM, C_IMG + C_DIM, 4, 4), jnp.float32),
        "b1": 0.1 * jax.random.normal(k4, (CONV_DIM,), jnp.float32),
        "w2": 0.1 * jax.random.normal(k5, (2 * CONV_DIM, CONV_DIM, 4, 4), jnp.float32),
        "b2": 0.1 * jax.random.normal(k6, (2 * CONV_DIM,), jnp.float32),
    }

    out = feature_extractor_forward(x, c, params)
    jax.block_until_ready(out)

    ref = _ref_forward(x, c, params)
    # bf16 operands with f32 accumulate -> loosened tolerance vs f32 reference
    np.testing.assert_allclose(np.asarray(out), np.asarray(ref), rtol=3e-2, atol=3e-2)

    print("KERNEL_OK")
</pallas_src>

<mosaic_0001>
module attributes {stable_mosaic.version = 11 : i64} {
  func.func @_mm_bias_kernel(%arg0: i32, %arg1: memref<128x128xbf16, #tpu.memory_space<vmem>>, %arg2: memref<128x128xbf16, #tpu.memory_space<vmem>>, %arg3: memref<1x128xf32, #tpu.memory_space<vmem>>, %arg4: memref<128x128xf32, #tpu.memory_space<vmem>>) attributes {dimension_semantics = [#tpu.dimension_semantics<parallel>], iteration_bounds = array<i64: 1>, scalar_prefetch = 0 : i64, scratch_operands = 0 : i64, tpu.core_type = #tpu.core_type<tc>, window_params = [{transform_indices = @transform_0, window_bounds = array<i64: 128, 128>}, {pipeline_mode = #tpu.pipeline_mode<synchronous>, transform_indices = @transform_1, window_bounds = array<i64: 128, 128>}, {pipeline_mode = #tpu.pipeline_mode<synchronous>, transform_indices = @transform_2, window_bounds = array<i64: 1, 128>}, {transform_indices = @transform_3, window_bounds = array<i64: 128, 128>}]} {
    %c0 = arith.constant 0 : index
    %c0_0 = arith.constant 0 : index
    %0 = vector.load %arg1[%c0, %c0_0] : memref<128x128xbf16, #tpu.memory_space<vmem>>, vector<128x128xbf16>
    %c0_1 = arith.constant 0 : index
    %c0_2 = arith.constant 0 : index
    %1 = vector.load %arg2[%c0_1, %c0_2] : memref<128x128xbf16, #tpu.memory_space<vmem>>, vector<128x128xbf16>
    %cst = arith.constant dense<0.000000e+00> : vector<128x128xf32>
    %2 = tpu.matmul %0, %1, %cst {dimension_numbers = #tpu.dot_dimension_numbers<[1], [0], [0], [1], [0, 0, 1, 1], [], []>} : vector<128x128xbf16>, vector<128x128xbf16>, vector<128x128xf32> -> vector<128x128xf32>
    %c0_3 = arith.constant 0 : index
    %c0_4 = arith.constant 0 : index
    %3 = vector.load %arg3[%c0_3, %c0_4] : memref<1x128xf32, #tpu.memory_space<vmem>>, vector<1x128xf32>
    %4 = vector.broadcast %3 : vector<1x128xf32> to vector<128x128xf32>
    %5 = arith.addf %2, %4 : vector<128x128xf32>
    %cst_5 = arith.constant 0.000000e+00 : f32
    %6 = vector.broadcast %cst_5 : f32 to vector<128x128xf32>
    %7 = arith.cmpf oge, %5, %6 : vector<128x128xf32>
    %cst_6 = arith.constant 0.00999999977 : f32
    %8 = vector.broadcast %cst_6 : f32 to vector<128x128xf32>
    %9 = arith.mulf %8, %5 : vector<128x128xf32>
    %10 = arith.select %7, %5, %9 : vector<128x128xi1>, vector<128x128xf32>
    %c0_7 = arith.constant 0 : index
    %c0_8 = arith.constant 0 : index
    %11 = vector.load %arg4[%c0_7, %c0_8] : memref<128x128xf32, #tpu.memory_space<vmem>>, vector<128x128xf32>
    tpu.vector_store %arg4[%c0_7, %c0_8], %10 {strides = array<i32>} : memref<128x128xf32, #tpu.memory_space<vmem>>, vector<128x128xf32>,
    return
  }
  func.func @transform_0(%arg0: i32) -> (i32, i32) {
    %c0_i32 = arith.constant 0 : i32
    %c0_i32_0 = arith.constant 0 : i32
    return %arg0, %c0_i32 : i32, i32
  }
  func.func @transform_1(%arg0: i32) -> (i32, i32) {
    %c0_i32 = arith.constant 0 : i32
    %c0_i32_0 = arith.constant 0 : i32
    %c0_i32_1 = arith.constant 0 : i32
    return %c0_i32, %c0_i32_0 : i32, i32
  }
  func.func @transform_2(%arg0: i32) -> (i32, i32) {
    %c0_i32 = arith.constant 0 : i32
    %c0_i32_0 = arith.constant 0 : i32
    %c0_i32_1 = arith.constant 0 : i32
    return %c0_i32, %c0_i32_0 : i32, i32
  }
  func.func @transform_3(%arg0: i32) -> (i32, i32) {
    %c0_i32 = arith.constant 0 : i32
    %c0_i32_0 = arith.constant 0 : i32
    return %arg0, %c0_i32 : i32, i32
  }
}

</mosaic_0001>

<llo_original>
// kernel: tpu_custom_call.1
$region0: #{tpu_custom_call.1}
  #allocation0 [shape = 'u32[]', space=smem, size = 0x4, offset = 0x4, fixed_abs, tag = 'smem constant byte address 0x4 - core index']
  #allocation1 [shape = 'u32[144,128]{1,0:T(1,128)}', space=vmem, size = 0x12000, scoped, tag = 'internal scratch']
  %s0 = inlined_call_operand.hbm [shape: bf16[128,128], index: 0, kind: input, shape index: {}]
  %s1 = inlined_call_operand.hbm [shape: bf16[128,128], index: 1, kind: input, shape index: {}]
  %s2 = inlined_call_operand.hbm [shape: f32[1,128], index: 2, kind: input, shape index: {}]
  %s3 = inlined_call_operand.hbm [shape: f32[128,128], index: 3, kind: output, shape index: {}]
  %s4 = sld [smem:[#allocation0]]
  $region34: #{tpu_custom_call.1} parent=0
    _
  %s6 = ssub.s32 1, %s4
  %s7 = scalar_select 0, %s6, %s4
  $region1: #{tpu_custom_call.1} parent=0
    #allocation2 [shape = 'u8[32768]{0}', space=vmem, size = 0x8000, scoped, tag = 'input window, operand 0, single buffered']
    #allocation3 [shape = 's32[1]{0}', space=sflag, size = 0x4, scoped, tag = 'scoped memory for tpu_custom_call.1']
    #allocation4 [shape = 's32[1]{0}', space=sflag, size = 0x4, scoped, tag = 'scoped memory for tpu_custom_call.1']
    #allocation5 [shape = 'u8[32768]{0}', space=vmem, size = 0x8000, scoped, tag = 'input window, operand 1, single buffered']
    #allocation6 [shape = 's32[1]{0}', space=sflag, size = 0x4, scoped, tag = 'scoped memory for tpu_custom_call.1']
    #allocation7 [shape = 'u8[512]{0}', space=vmem, size = 0x400, scoped, tag = 'input window, operand 2, single buffered']
    #allocation8 [shape = 'u8[65536]{0}', space=vmem, size = 0x10000, scoped, tag = 'output window, operand 0, single buffered']
    %8 = vsyncpa [#allocation3], 0
    %9 = vsyncpa [#allocation6], 0
    %10 = vsyncpa [#allocation4], 0
    // Predicated region
    $region2: #{tpu_custom_call.1} parent=1 // pred_check
      _
    $region3: #{tpu_custom_call.1} parent=1 // pred_check_branch
      %12 = sbr.rel (0) target = $region5
    $region4: #{tpu_custom_call.1} parent=1 // pred_region
      %s14 = ssub.s32 1024, 1024
      %15 = vsyncadd [#allocation3], %s14
      %s16 = sshll.u32 [#allocation2], 4
      %s17 = int_to_ptr.vmem [resolvable:$true] %s16
      %22 = dma.hbm_to_vmem [thread:$0]  %s0, 1024, %s17, [#allocation3], 64, 64, 4
    $region5: #{tpu_custom_call.1} parent=1 // pred_fallthru
      _
    // Predicated region
    $region6: #{tpu_custom_call.1} parent=1 // pred_check
      _
    $region7: #{tpu_custom_call.1} parent=1 // pred_check_branch
      %24 = sbr.rel (0) target = $region9
    $region8: #{tpu_custom_call.1} parent=1 // pred_region
      %s26 = ssub.s32 1024, 1024
      %27 = vsyncadd [#allocation6], %s26
      %s28 = sshll.u32 [#allocation5], 4
      %s29 = int_to_ptr.vmem [resolvable:$true] %s28
      %34 = dma.hbm_to_vmem [thread:$0]  %s1, 1024, %s29, [#allocation6], 64, 64, 4
    $region9: #{tpu_custom_call.1} parent=1 // pred_fallthru
      _
    // Predicated region
    $region10: #{tpu_custom_call.1} parent=1 // pred_check
      _
    $region11: #{tpu_custom_call.1} parent=1 // pred_check_branch
      %36 = sbr.rel (0) target = $region13
    $region12: #{tpu_custom_call.1} parent=1 // pred_region
      %s38 = ssub.s32 16, 16
      %39 = vsyncadd [#allocation6], %s38
      %s41 = sshll.u32 [#allocation7], 4
      %s42 = int_to_ptr.vmem [resolvable:$true] %s41
      %44 = dma.hbm_to_vmem [thread:$0]  %s2, 16, %s42, [#allocation6]
    $region13: #{tpu_custom_call.1} parent=1 // pred_fallthru
      _
    // Predicated region
    $region14: #{tpu_custom_call.1} parent=1 // pred_check
      _
    $region15: #{tpu_custom_call.1} parent=1 // pred_check_branch
      %46 = sbr.rel (0) target = $region17
    $region16: #{tpu_custom_call.1} parent=1 // pred_region
      %47 = dma.done [#allocation3], 1024
    $region17: #{tpu_custom_call.1} parent=1 // pred_fallthru
      _
    // Predicated region
    $region18: #{tpu_custom_call.1} parent=1 // pred_check
      _
    $region19: #{tpu_custom_call.1} parent=1 // pred_check_branch
      %49 = sbr.rel (0) target = $region21
    $region20: #{tpu_custom_call.1} parent=1 // pred_region
      %50 = dma.done [#allocation6], 1024
    $region21: #{tpu_custom_call.1} parent=1 // pred_fallthru
      _
    // Predicated region
    $region22: #{tpu_custom_call.1} parent=1 // pred_check
      _
    $region23: #{tpu_custom_call.1} parent=1 // pred_check_branch
      %52 = sbr.rel (0) target = $region25
    $region24: #{tpu_custom_call.1} parent=1 // pred_region
      %53 = dma.done [#allocation6], 16
    $region25: #{tpu_custom_call.1} parent=1 // pred_fallthru
      _
    %v55 = vld [vmem:[#allocation2] sm:$0xf]
    %v56 = vld [vmem:[#allocation2 + $0x4] sm:$0xf]
    %v57 = vld [vmem:[#allocation2 + $0x8] sm:$0xf]
    %v58 = vld [vmem:[#allocation2 + $0xc] sm:$0xf]
    %v59 = vld [vmem:[#allocation2 + $0x10] sm:$0xf]
    %v60 = vld [vmem:[#allocation2 + $0x14] sm:$0xf]
    %v61 = vld [vmem:[#allocation2 + $0x18] sm:$0xf]
    %v62 = vld [vmem:[#allocation2 + $0x1c] sm:$0xf]
    %v63 = vld [vmem:[#allocation2 + $0x20] sm:$0xf]
    %v64 = vld [vmem:[#allocation2 + $0x24] sm:$0xf]
    %v65 = vld [vmem:[#allocation2 + $0x28] sm:$0xf]
    %v66 = vld [vmem:[#allocation2 + $0x2c] sm:$0xf]
    %v67 = vld [vmem:[#allocation2 + $0x30] sm:$0xf]
    %v68 = vld [vmem:[#allocation2 + $0x34] sm:$0xf]
    %v69 = vld [vmem:[#allocation2 + $0x38] sm:$0xf]
    %v70 = vld [vmem:[#allocation2 + $0x3c] sm:$0xf]
    %v71 = vld [vmem:[#allocation5] sm:$0xf]
    %v72 = vld [vmem:[#allocation5 + $0x4] sm:$0xf]
    %v73 = vld [vmem:[#allocation5 + $0x8] sm:$0xf]
    %v74 = vld [vmem:[#allocation5 + $0xc] sm:$0xf]
    %v75 = vld [vmem:[#allocation5 + $0x10] sm:$0xf]
    %v76 = vld [vmem:[#allocation5 + $0x14] sm:$0xf]
    %v77 = vld [vmem:[#allocation5 + $0x18] sm:$0xf]
    %v78 = vld [vmem:[#allocation5 + $0x1c] sm:$0xf]
    %v79 = vld [vmem:[#allocation5 + $0x20] sm:$0xf]
    %v80 = vld [vmem:[#allocation5 + $0x24] sm:$0xf]
    %v81 = vld [vmem:[#allocation5 + $0x28] sm:$0xf]
    %v82 = vld [vmem:[#allocation5 + $0x2c] sm:$0xf]
    %v83 = vld [vmem:[#allocation5 + $0x30] sm:$0xf]
    %v84 = vld [vmem:[#allocation5 + $0x34] sm:$0xf]
    %v85 = vld [vmem:[#allocation5 + $0x38] sm:$0xf]
    %v86 = vld [vmem:[#allocation5 + $0x3c] sm:$0xf]
    %v87 = vld [vmem:[#allocation7] sm:$0x1]
    %v89 = vlaneseq
    %v90 = vshrl.u32 %v89, 7
    %v91 = vsub.s32 0, %v90
    %v92 = vrot.slane %v87, %v91
    %v110 = vunpack.c.l.b16 %v55
    %v111 = vunpack.c.l.b16 %v56
    %v112 = vunpack.c.l.b16 %v57
    %v113 = vunpack.c.l.b16 %v58
    %v114 = vunpack.c.l.b16 %v59
    %v115 = vunpack.c.l.b16 %v60
    %v116 = vunpack.c.l.b16 %v61
    %v117 = vunpack.c.l.b16 %v62
    %v118 = vunpack.c.l.b16 %v63
    %v119 = vunpack.c.l.b16 %v64
    %v120 = vunpack.c.l.b16 %v65
    %v121 = vunpack.c.l.b16 %v66
    %v122 = vunpack.c.l.b16 %v67
    %v123 = vunpack.c.l.b16 %v68
    %v124 = vunpack.c.l.b16 %v69
    %v125 = vunpack.c.l.b16 %v70
    %v126 = vpack.c.b16 %v111, %v110
    %v127 = vpack.c.b16 %v113, %v112
    %v128 = vpack.c.b16 %v115, %v114
    %v129 = vpack.c.b16 %v117, %v116
    %v130 = vpack.c.b16 %v119, %v118
    %v131 = vpack.c.b16 %v121, %v120
    %v132 = vpack.c.b16 %v123, %v122
    %v133 = vpack.c.b16 %v125, %v124
    %v158 = vunpack.c.l.b16 %v71
    %v159 = vunpack.c.l.b16 %v72
    %v160 = vunpack.c.l.b16 %v73
    %v161 = vunpack.c.l.b16 %v74
    %v162 = vunpack.c.l.b16 %v75
    %v163 = vunpack.c.l.b16 %v76
    %v164 = vunpack.c.l.b16 %v77
    %v165 = vunpack.c.l.b16 %v78
    %v166 = vunpack.c.l.b16 %v79
    %v167 = vunpack.c.l.b16 %v80
    %v168 = vunpack.c.l.b16 %v81
    %v169 = vunpack.c.l.b16 %v82
    %v170 = vunpack.c.l.b16 %v83
    %v171 = vunpack.c.l.b16 %v84
    %v172 = vunpack.c.l.b16 %v85
    %v173 = vunpack.c.l.b16 %v86
    %v174 = vpack.c.b16 %v159, %v158
    %v175 = vpack.c.b16 %v161, %v160
    %v176 = vpack.c.b16 %v163, %v162
    %v177 = vpack.c.b16 %v165, %v164
    %v178 = vpack.c.b16 %v167, %v166
    %v179 = vpack.c.b16 %v169, %v168
    %v180 = vpack.c.b16 %v171, %v170
    %v181 = vpack.c.b16 %v173, %v172
    %190 = vmatprep.subr.bf16.mxu0 0
    %191 = vmatpush1.bf16.msra.mxu0 %v174
    %192 = vmatprep.subr.bf16.mxu0 0
    %193 = vmatpush1.bf16.msra.mxu0 %v175
    %194 = vmatprep.subr.bf16.mxu0 0
    %195 = vmatpush1.bf16.msra.mxu0 %v176
    %196 = vmatprep.subr.bf16.mxu0 0
    %197 = vmatpush1.bf16.msra.mxu0 %v177
    %198 = vmatprep.subr.bf16.mxu0 0
    %199 = vmatpush1.bf16.msra.mxu0 %v178
    %200 = vmatprep.subr.bf16.mxu0 0
    %201 = vmatpush1.bf16.msra.mxu0 %v179
    %202 = vmatprep.subr.bf16.mxu0 0
    %203 = vmatpush1.bf16.msra.mxu0 %v180
    %204 = vmatprep.subr.bf16.mxu0 0
    %205 = vmatpush1.bf16.msra.mxu0 %v181
    %206 = vmatprep.subr.bf16.mxu0 0
    %207 = vmatpush1.bf16.msra.mxu0 0
    %208 = vmatprep.subr.bf16.mxu0 0
    %209 = vmatpush1.bf16.msra.mxu0 0
    %210 = vmatprep.subr.bf16.mxu0 0
    %211 = vmatpush1.bf16.msra.mxu0 0
    %212 = vmatprep.subr.bf16.mxu0 0
    %213 = vmatpush1.bf16.msra.mxu0 0
    %214 = vmatprep.subr.bf16.mxu0 0
    %215 = vmatpush1.bf16.msra.mxu0 0
    %216 = vmatprep.subr.bf16.mxu0 0
    %217 = vmatpush1.bf16.msra.mxu0 0
    %218 = vmatprep.subr.bf16.mxu0 0
    %219 = vmatpush1.bf16.msra.mxu0 0
    %220 = vmatprep.subr.bf16.mxu0 0
    %221 = vmatpush1.bf16.msra.mxu0 0
    %222 = vmatprep.mubr.bf16.mxu0 0
    %223 = vmatmul.mubr.bf16.gmra.mrb[0].mxu0 %v126
    %v224 = vpop.f32.mrb[0].mxu0
    %v225 = vadd.f32 %v92, %v224
    %v226 = vpop.f32.mrb[0].mxu0
    %v227 = vpop.f32.mrb[0].mxu0
    %v228 = vadd.f32 %v92, %v227
    %v229 = vpop.f32.mrb[0].mxu0
    %230 = vmatprep.mubr.bf16.mxu0 0
    %231 = vmatmul.mubr.bf16.gmra.mrb[0].mxu0 %v127
    %v232 = vpop.f32.mrb[0].mxu0
    %v233 = vadd.f32 %v92, %v232
    %v234 = vpop.f32.mrb[0].mxu0
    %v235 = vpop.f32.mrb[0].mxu0
    %v236 = vadd.f32 %v92, %v235
    %v237 = vpop.f32.mrb[0].mxu0
    %238 = vmatprep.mubr.bf16.mxu0 0
    %239 = vmatmul.mubr.bf16.gmra.mrb[0].mxu0 %v128
    %v240 = vpop.f32.mrb[0].mxu0
    %v241 = vadd.f32 %v92, %v240
    %v242 = vpop.f32.mrb[0].mxu0
    %v243 = vpop.f32.mrb[0].mxu0
    %v244 = vadd.f32 %v92, %v243
    %v245 = vpop.f32.mrb[0].mxu0
    %246 = vmatprep.mubr.bf16.mxu0 0
    %247 = vmatmul.mubr.bf16.gmra.mrb[0].mxu0 %v129
    %v248 = vpop.f32.mrb[0].mxu0
    %v249 = vadd.f32 %v92, %v248
    %v250 = vpop.f32.mrb[0].mxu0
    %v251 = vpop.f32.mrb[0].mxu0
    %v252 = vadd.f32 %v92, %v251
    %v253 = vpop.f32.mrb[0].mxu0
    %254 = vmatprep.mubr.bf16.mxu0 0
    %255 = vmatmul.mubr.bf16.gmra.mrb[0].mxu0 %v130
    %v256 = vpop.f32.mrb[0].mxu0
    %v257 = vadd.f32 %v92, %v256
    %v258 = vpop.f32.mrb[0].mxu0
    %v259 = vpop.f32.mrb[0].mxu0
    %v260 = vadd.f32 %v92, %v259
    %v261 = vpop.f32.mrb[0].mxu0
    %262 = vmatprep.mubr.bf16.mxu0 0
    %263 = vmatmul.mubr.bf16.gmra.mrb[0].mxu0 %v131
    %v264 = vpop.f32.mrb[0].mxu0
    %v265 = vadd.f32 %v92, %v264
    %v266 = vpop.f32.mrb[0].mxu0
    %v267 = vpop.f32.mrb[0].mxu0
    %v268 = vadd.f32 %v92, %v267
    %v269 = vpop.f32.mrb[0].mxu0
    %270 = vmatprep.mubr.bf16.mxu0 0
    %271 = vmatmul.mubr.bf16.gmra.mrb[0].mxu0 %v132
    %v272 = vpop.f32.mrb[0].mxu0
    %v273 = vadd.f32 %v92, %v272
    %v274 = vpop.f32.mrb[0].mxu0
    %v275 = vpop.f32.mrb[0].mxu0
    %v276 = vadd.f32 %v92, %v275
    %v277 = vpop.f32.mrb[0].mxu0
    %278 = vmatprep.mubr.bf16.mxu0 0
    %279 = vmatmul.mubr.bf16.gmra.mrb[0].mxu0 %v133
    %v280 = vpop.f32.mrb[0].mxu0
    %v281 = vadd.f32 %v92, %v280
    %v282 = vpop.f32.mrb[0].mxu0
    %v283 = vpop.f32.mrb[0].mxu0
    %v284 = vadd.f32 %v92, %v283
    %v285 = vpop.f32.mrb[0].mxu0
    %286 = vdwg.mxu0
    %vm287 = vcmp.ge.f32.partialorder %v225, 0.0
    %vm288 = vcmp.ge.f32.partialorder %v228, 0.0
    %vm289 = vcmp.ge.f32.partialorder %v233, 0.0
    %vm290 = vcmp.ge.f32.partialorder %v236, 0.0
    %vm291 = vcmp.ge.f32.partialorder %v241, 0.0
    %vm292 = vcmp.ge.f32.partialorder %v244, 0.0
    %vm293 = vcmp.ge.f32.partialorder %v249, 0.0
    %vm294 = vcmp.ge.f32.partialorder %v252, 0.0
    %vm295 = vcmp.ge.f32.partialorder %v257, 0.0
    %vm296 = vcmp.ge.f32.partialorder %v260, 0.0
    %vm297 = vcmp.ge.f32.partialorder %v265, 0.0
    %vm298 = vcmp.ge.f32.partialorder %v268, 0.0
    %vm299 = vcmp.ge.f32.partialorder %v273, 0.0
    %vm300 = vcmp.ge.f32.partialorder %v276, 0.0
    %vm301 = vcmp.ge.f32.partialorder %v281, 0.0
    %vm302 = vcmp.ge.f32.partialorder %v284, 0.0
    %v303 = vmul.f32 %v225, 0.01
    %v304 = vmul.f32 %v228, 0.01
    %v305 = vmul.f32 %v233, 0.01
    %v306 = vmul.f32 %v236, 0.01
    %v307 = vmul.f32 %v241, 0.01
    %v308 = vmul.f32 %v244, 0.01
    %v309 = vmul.f32 %v249, 0.01
    %v310 = vmul.f32 %v252, 0.01
    %v311 = vmul.f32 %v257, 0.01
    %v312 = vmul.f32 %v260, 0.01
    %v313 = vmul.f32 %v265, 0.01
    %v314 = vmul.f32 %v268, 0.01
    %v315 = vmul.f32 %v273, 0.01
    %v316 = vmul.f32 %v276, 0.01
    %v317 = vmul.f32 %v281, 0.01
    %v318 = vmul.f32 %v284, 0.01
    %v319 = vsel %vm287, %v225, %v303
    %v320 = vsel %vm288, %v228, %v304
    %v321 = vsel %vm289, %v233, %v305
    %v322 = vsel %vm290, %v236, %v306
    %v323 = vsel %vm291, %v241, %v307
    %v324 = vsel %vm292, %v244, %v308
    %v325 = vsel %vm293, %v249, %v309
    %v326 = vsel %vm294, %v252, %v310
    %v327 = vsel %vm295, %v257, %v311
    %v328 = vsel %vm296, %v260, %v312
    %v329 = vsel %vm297, %v265, %v313
    %v330 = vsel %vm298, %v268, %v314
    %v331 = vsel %vm299, %v273, %v315
    %v332 = vsel %vm300, %v276, %v316
    %v333 = vsel %vm301, %v281, %v317
    %v334 = vsel %vm302, %v284, %v318
    %335 = vst [vmem:[#allocation8] sm:$0xff] %v319
    %336 = vst [vmem:[#allocation8 + $0x8] sm:$0xff] %v320
    %337 = vst [vmem:[#allocation8 + $0x10] sm:$0xff] %v321
    %338 = vst [vmem:[#allocation8 + $0x18] sm:$0xff] %v322
    %339 = vst [vmem:[#allocation8 + $0x20] sm:$0xff] %v323
    %340 = vst [vmem:[#allocation8 + $0x28] sm:$0xff] %v324
    %341 = vst [vmem:[#allocation8 + $0x30] sm:$0xff] %v325
    %342 = vst [vmem:[#allocation8 + $0x38] sm:$0xff] %v326
    %343 = vst [vmem:[#allocation8 + $0x40] sm:$0xff] %v327
    %344 = vst [vmem:[#allocation8 + $0x48] sm:$0xff] %v328
    %345 = vst [vmem:[#allocation8 + $0x50] sm:$0xff] %v329
    %346 = vst [vmem:[#allocation8 + $0x58] sm:$0xff] %v330
    %347 = vst [vmem:[#allocation8 + $0x60] sm:$0xff] %v331
    %348 = vst [vmem:[#allocation8 + $0x68] sm:$0xff] %v332
    %349 = vst [vmem:[#allocation8 + $0x70] sm:$0xff] %v333
    %350 = vst [vmem:[#allocation8 + $0x78] sm:$0xff] %v334
    // Predicated region
    $region26: #{tpu_custom_call.1} parent=1 // pred_check
      _
    $region27: #{tpu_custom_call.1} parent=1 // pred_check_branch
      %352 = sbr.rel (0) target = $region29
    $region28: #{tpu_custom_call.1} parent=1 // pred_region
      %s354 = ssub.s32 2048, 2048
      %355 = vsyncadd [#allocation4], %s354
      %s356 = sshll.u32 [#allocation8], 4
      %s357 = int_to_ptr.vmem [resolvable:$true] %s356
      %362 = dma.vmem_to_hbm [thread:$0]  %s357, 2048, %s3, [#allocation4], 128, 128, 8
    $region29: #{tpu_custom_call.1} parent=1 // pred_fallthru
      _
    // Predicated region
    $region30: #{tpu_custom_call.1} parent=1 // pred_check
      _
    $region31: #{tpu_custom_call.1} parent=1 // pred_check_branch
      %364 = sbr.rel (0) target = $region33
    $region32: #{tpu_custom_call.1} parent=1 // pred_region
      %365 = dma.done [#allocation4], 2048
    $region33: #{tpu_custom_call.1} parent=1 // pred_fallthru
      _
    %366 = vsyncpa [#allocation3], 1
    %367 = vsyncpa [#allocation6], 1
    %368 = vsyncpa [#allocation4], 1

</llo_original>
